<compile_context>
chip_gen: v6e
topology: v6e:2x2x1
jax: 0.10.0
libtpu: 0.0.40
codegen_flags: <defaults>
</compile_context>

<pallas_src>
import functools

import jax
import jax.numpy as jnp
from jax import lax
from jax.experimental import pallas as pl
from jax.experimental.pallas import tpu as pltpu


def _cosine_kernel(x1_ref, x2t_ref, r1_ref, r2_ref, o_ref, *, stripe_x1, tk):
    k = pl.program_id(2)

    @pl.when(k == 0)
    def _init():
        o_ref[...] = jnp.zeros_like(o_ref)

    if stripe_x1:
        # Whole (tm, Dp) x1 stripe is resident; slice this step's k-chunk.
        start = pl.multiple_of(k * tk, tk)
        x1 = x1_ref[:, pl.ds(start, tk)]
    else:
        x1 = x1_ref[...]                       # (tm, tk)

    # MXU matmul with f32 accumulation directly into the (VMEM-resident) output.
    o_ref[...] += jnp.dot(x1, x2t_ref[...], preferred_element_type=jnp.float32)

    @pl.when(k == pl.num_programs(2) - 1)
    def _finalize():
        # Rank-1 normalization with precomputed inverse row norms.
        o_ref[...] *= r1_ref[...] * r2_ref[...]


def _round_up(x: int, m: int) -> int:
    return ((x + m - 1) // m) * m


def _balanced_tile(dim: int, tmax: int, align: int) -> int:
    """Largest tile <= tmax that splits `dim` evenly-ish (avoids pad blowup)."""
    splits = max(1, -(-dim // tmax))
    t = -(-dim // splits)
    return min(_round_up(t, align), _round_up(dim, align))


@functools.partial(jax.jit,
                   static_argnames=("tm_max", "tn_max", "tk_max", "mxu_dtype"))
def cosine_similarity_pallas(x1: jax.Array, x2: jax.Array, *,
                             tm_max: int = 512, tn_max: int = 512,
                             tk_max: int = 512,
                             mxu_dtype=None) -> jax.Array:
    """Pairwise cosine similarity: (M, D), (N, D) -> (M, N) float32."""
    M, D = x1.shape
    N, D2 = x2.shape
    assert D == D2, "feature dims must match"

    # Tile sizes: sublane dims multiples of 8, lane dims multiples of 128.
    tm = _balanced_tile(M, tm_max, 8)
    tn = _balanced_tile(N, tn_max, 128)
    tk = _balanced_tile(D, tk_max, 128)
    Mp, Np, Dp = _round_up(M, tm), _round_up(N, tn), _round_up(D, tk)

    # Hoisted row inverse-norms, computed once in f32 on unpadded data.
    r1 = lax.rsqrt(jnp.sum(x1.astype(jnp.float32) ** 2, axis=1, keepdims=True))
    r2 = lax.rsqrt(jnp.sum(x2.astype(jnp.float32) ** 2, axis=1, keepdims=True)).T
    # TODO(synk): no eps clamp on the denominator (matches the reference module,
    # which also divides by the raw norm product).
    r1p = jnp.pad(r1, ((0, Mp - M), (0, 0)), constant_values=1.0)   # (Mp, 1)
    r2p = jnp.pad(r2, ((0, 0), (0, Np - N)), constant_values=1.0)   # (1, Np)

    # Pad inputs; transpose x2 once (fuses with the pad) so the MXU operand is
    # already (Dp, Np) — no per-tile relayout.
    x1p = jnp.pad(x1, ((0, Mp - M), (0, Dp - D)))
    x2tp = jnp.pad(x2.T, ((0, Dp - D), (0, Np - N)))
    if mxu_dtype is not None:
        x1p = x1p.astype(mxu_dtype)
        x2tp = x2tp.astype(mxu_dtype)

    itemsize = jnp.dtype(x1p.dtype).itemsize

    # Keep the whole x1 i-stripe resident when cheap: it is then DMA'd from HBM
    # once per i instead of once per (j, k).
    stripe_x1 = 2 * tm * Dp * itemsize <= 8 * 1024 * 1024
    if stripe_x1:
        x1_spec = pl.BlockSpec((tm, Dp), lambda i, j, k: (i, 0))
        x1_bytes = 2 * tm * Dp * itemsize
    else:
        x1_spec = pl.BlockSpec((tm, tk), lambda i, j, k: (i, k))
        x1_bytes = 2 * tm * tk * itemsize

    # Double-buffered input + output tile footprint; leave headroom for the
    # compiler.  Defaults stay at the 32 MiB floor (safe on v5e/v6e/v7x).
    vmem_est = (x1_bytes + 2 * tk * tn * itemsize + 2 * tm * tn * 4
                + 2 * (tm + tn) * 4)
    vmem_limit = int(min(max(32 * 1024 * 1024, 1.4 * vmem_est),
                         112 * 1024 * 1024))

    grid = (Mp // tm, Np // tn, Dp // tk)
    kernel = functools.partial(_cosine_kernel, stripe_x1=stripe_x1, tk=tk)

    out = pl.pallas_call(
        kernel,
        out_shape=jax.ShapeDtypeStruct((Mp, Np), jnp.float32),
        grid_spec=pltpu.PrefetchScalarGridSpec(
            num_scalar_prefetch=0,
            grid=grid,
            in_specs=[
                x1_spec,                                            # x1 (padded)
                pl.BlockSpec((tk, tn), lambda i, j, k: (k, j)),     # x2^T (padded)
                pl.BlockSpec((tm, 1), lambda i, j, k: (i, 0)),      # 1/||x1||
                pl.BlockSpec((1, tn), lambda i, j, k: (0, j)),      # 1/||x2||
            ],
            out_specs=pl.BlockSpec((tm, tn), lambda i, j, k: (i, j)),
        ),
        compiler_params=pltpu.CompilerParams(
            dimension_semantics=("parallel", "parallel", "arbitrary"),
            vmem_limit_bytes=vmem_limit,
        ),
    )(x1p, x2tp, r1p, r2p)

    # Padded rows/cols (1.0 * 0 accumulator) live only in the region sliced away.
    return out[:M, :N]


def cosine_similarity_ref(x1: jax.Array, x2: jax.Array) -> jax.Array:
    """Pure-JAX reference mirroring the PyTorch forward exactly."""
    x2t = x2.T
    x = x1 @ x2t
    x1_ = jnp.linalg.norm(x1, axis=1)[None, :].T       # (M, 1)
    x2_ = jnp.linalg.norm(x2t, axis=0)[None, :]        # (1, N)
    x_frob = x1_ @ x2_
    return x * (1.0 / x_frob)


if __name__ == "__main__":
    key = jax.random.PRNGKey(0)
    k1, k2 = jax.random.split(key)
    M, N, D = 16, 8, 32
    x1 = jax.random.normal(k1, (M, D), dtype=jnp.float32)
    x2 = jax.random.normal(k2, (N, D), dtype=jnp.float32)

    out = cosine_similarity_pallas(x1, x2)
    out = jax.block_until_ready(out)

    ref = cosine_similarity_ref(x1, x2)
    assert out.shape == (M, N)
    assert jnp.allclose(out, ref, atol=1e-4, rtol=1e-4), "mismatch vs reference"

    print("KERNEL_OK")
</pallas_src>

<mosaic_0001>
module attributes {stable_mosaic.version = 11 : i64} {
  func.func @_cosine_kernel(%arg0: i32, %arg1: i32, %arg2: i32, %arg3: memref<16x128xf32, #tpu.memory_space<vmem>>, %arg4: memref<128x128xf32, #tpu.memory_space<vmem>>, %arg5: memref<16x1xf32, #tpu.memory_space<vmem>>, %arg6: memref<1x128xf32, #tpu.memory_space<vmem>>, %arg7: memref<16x128xf32, #tpu.memory_space<vmem>>) attributes {dimension_semantics = [#tpu.dimension_semantics<parallel>, #tpu.dimension_semantics<parallel>, #tpu.dimension_semantics<arbitrary>], iteration_bounds = array<i64: 1, 1, 1>, scalar_prefetch = 0 : i64, scratch_operands = 0 : i64, tpu.core_type = #tpu.core_type<tc>, window_params = [{transform_indices = @transform_0, window_bounds = array<i64: 16, 128>}, {transform_indices = @transform_1, window_bounds = array<i64: 128, 128>}, {transform_indices = @transform_2, window_bounds = array<i64: 16, 1>}, {transform_indices = @transform_3, window_bounds = array<i64: 1, 128>}, {transform_indices = @transform_4, window_bounds = array<i64: 16, 128>}]} {
    %c0_i32 = arith.constant 0 : i32
    %0 = arith.cmpi eq, %arg2, %c0_i32 : i32
    %1 = arith.extui %0 : i1 to i32
    %c0_i32_0 = arith.constant 0 : i32
    %2 = arith.cmpi ne, %1, %c0_i32_0 : i32
    scf.if %2 {
      %cst_9 = arith.constant 0.000000e+00 : f32
      %15 = vector.broadcast %cst_9 : f32 to vector<16x128xf32>
      %c0_10 = arith.constant 0 : index
      %c0_11 = arith.constant 0 : index
      %16 = vector.load %arg7[%c0_10, %c0_11] : memref<16x128xf32, #tpu.memory_space<vmem>>, vector<16x128xf32>
      tpu.vector_store %arg7[%c0_10, %c0_11], %15 {strides = array<i32>} : memref<16x128xf32, #tpu.memory_space<vmem>>, vector<16x128xf32>,
    } else {
    }
    %c128_i32 = arith.constant 128 : i32
    %3 = arith.muli %arg2, %c128_i32 : i32
    %4 = tpu.assume_multiple %3, 128 : i32
    %c0 = arith.constant 0 : index
    %5 = arith.index_cast %4 : i32 to index
    %6 = vector.load %arg3[%c0, %5] : memref<16x128xf32, #tpu.memory_space<vmem>>, vector<16x128xf32>
    %c0_1 = arith.constant 0 : index
    %c0_2 = arith.constant 0 : index
    %7 = vector.load %arg7[%c0_1, %c0_2] : memref<16x128xf32, #tpu.memory_space<vmem>>, vector<16x128xf32>
    %c0_3 = arith.constant 0 : index
    %c0_4 = arith.constant 0 : index
    %8 = vector.load %arg4[%c0_3, %c0_4] : memref<128x128xf32, #tpu.memory_space<vmem>>, vector<128x128xf32>
    %cst = arith.constant dense<0.000000e+00> : vector<16x128xf32>
    %9 = tpu.matmul %6, %8, %cst {dimension_numbers = #tpu.dot_dimension_numbers<[1], [0], [0], [1], [0, 0, 1, 1], [], []>} : vector<16x128xf32>, vector<128x128xf32>, vector<16x128xf32> -> vector<16x128xf32>
    %10 = arith.addf %7, %9 : vector<16x128xf32>
    %c0_5 = arith.constant 0 : index
    %c0_6 = arith.constant 0 : index
    %11 = vector.load %arg7[%c0_5, %c0_6] : memref<16x128xf32, #tpu.memory_space<vmem>>, vector<16x128xf32>
    tpu.vector_store %arg7[%c0_5, %c0_6], %10 {strides = array<i32>} : memref<16x128xf32, #tpu.memory_space<vmem>>, vector<16x128xf32>,
    %c0_i32_7 = arith.constant 0 : i32
    %12 = arith.cmpi eq, %arg2, %c0_i32_7 : i32
    %13 = arith.extui %12 : i1 to i32
    %c0_i32_8 = arith.constant 0 : i32
    %14 = arith.cmpi ne, %13, %c0_i32_8 : i32
    scf.if %14 {
      %c0_9 = arith.constant 0 : index
      %c0_10 = arith.constant 0 : index
      %15 = vector.load %arg7[%c0_9, %c0_10] : memref<16x128xf32, #tpu.memory_space<vmem>>, vector<16x128xf32>
      %c0_11 = arith.constant 0 : index
      %c0_12 = arith.constant 0 : index
      %16 = vector.load %arg5[%c0_11, %c0_12] : memref<16x1xf32, #tpu.memory_space<vmem>>, vector<16x1xf32>
      %c0_13 = arith.constant 0 : index
      %c0_14 = arith.constant 0 : index
      %17 = vector.load %arg6[%c0_13, %c0_14] : memref<1x128xf32, #tpu.memory_space<vmem>>, vector<1x128xf32>
      %18 = vector.broadcast %16 : vector<16x1xf32> to vector<16x128xf32>
      %19 = vector.broadcast %17 : vector<1x128xf32> to vector<16x128xf32>
      %20 = arith.mulf %18, %19 : vector<16x128xf32>
      %21 = arith.mulf %15, %20 : vector<16x128xf32>
      %c0_15 = arith.constant 0 : index
      %c0_16 = arith.constant 0 : index
      %22 = vector.load %arg7[%c0_15, %c0_16] : memref<16x128xf32, #tpu.memory_space<vmem>>, vector<16x128xf32>
      tpu.vector_store %arg7[%c0_15, %c0_16], %21 {strides = array<i32>} : memref<16x128xf32, #tpu.memory_space<vmem>>, vector<16x128xf32>,
    } else {
    }
    return
  }
  func.func @transform_0(%arg0: i32, %arg1: i32, %arg2: i32) -> (i32, i32) {
    %c0_i32 = arith.constant 0 : i32
    %c0_i32_0 = arith.constant 0 : i32
    return %arg0, %c0_i32 : i32, i32
  }
  func.func @transform_1(%arg0: i32, %arg1: i32, %arg2: i32) -> (i32, i32) {
    %c0_i32 = arith.constant 0 : i32
    return %arg2, %arg1 : i32, i32
  }
  func.func @transform_2(%arg0: i32, %arg1: i32, %arg2: i32) -> (i32, i32) {
    %c0_i32 = arith.constant 0 : i32
    %c0_i32_0 = arith.constant 0 : i32
    return %arg0, %c0_i32 : i32, i32
  }
  func.func @transform_3(%arg0: i32, %arg1: i32, %arg2: i32) -> (i32, i32) {
    %c0_i32 = arith.constant 0 : i32
    %c0_i32_0 = arith.constant 0 : i32
    return %c0_i32, %arg1 : i32, i32
  }
  func.func @transform_4(%arg0: i32, %arg1: i32, %arg2: i32) -> (i32, i32) {
    %c0_i32 = arith.constant 0 : i32
    return %arg0, %arg1 : i32, i32
  }
}

</mosaic_0001>

<llo_original>
// kernel: cosine_similarity_pallas.1
$region0: #{cosine_similarity_pallas.1}
  #allocation0 [shape = 'u32[]', space=smem, size = 0x4, offset = 0x4, fixed_abs, tag = 'smem constant byte address 0x4 - core index']
  #allocation1 [shape = 'u32[144,128]{1,0:T(1,128)}', space=vmem, size = 0x12000, scoped, tag = 'internal scratch']
  %s0 = inlined_call_operand.vmem [shape: f32[16,128], index: 0, kind: input, shape index: {}]
  %s1 = inlined_call_operand.vmem [shape: f32[128,128], index: 1, kind: input, shape index: {}]
  %s2 = inlined_call_operand.vmem [shape: f32[16,1], index: 2, kind: input, shape index: {}]
  %s3 = inlined_call_operand.vmem [shape: f32[1,128], index: 3, kind: input, shape index: {}]
  %s4 = inlined_call_operand.vmem [shape: f32[16,128], index: 4, kind: output, shape index: {}]
  %s5 = sld [smem:[#allocation0]]
  $region34: #{cosine_similarity_pallas.1} parent=0
    _
  %s7 = ssub.s32 1, %s5
  %s8 = scalar_select 0, %s7, %s5
  // Predicated region
  $region2: #{cosine_similarity_pallas.1} parent=0 // pred_check
    _
  $region3: #{cosine_similarity_pallas.1} parent=0 // pred_check_branch
    %10 = sbr.rel (0) target = $region5
  $region4: #{cosine_similarity_pallas.1} parent=0 // pred_region
    _
  $region5: #{cosine_similarity_pallas.1} parent=0 // pred_fallthru
    _
  // Predicated region
  $region6: #{cosine_similarity_pallas.1} parent=0 // pred_check
    _
  $region7: #{cosine_similarity_pallas.1} parent=0 // pred_check_branch
    %12 = sbr.rel (0) target = $region9
  $region8: #{cosine_similarity_pallas.1} parent=0 // pred_region
    _
  $region9: #{cosine_similarity_pallas.1} parent=0 // pred_fallthru
    _
  // Predicated region
  $region10: #{cosine_similarity_pallas.1} parent=0 // pred_check
    _
  $region11: #{cosine_similarity_pallas.1} parent=0 // pred_check_branch
    %14 = sbr.rel (0) target = $region13
  $region12: #{cosine_similarity_pallas.1} parent=0 // pred_region
    _
  $region13: #{cosine_similarity_pallas.1} parent=0 // pred_fallthru
    _
  // Predicated region
  $region14: #{cosine_similarity_pallas.1} parent=0 // pred_check
    _
  $region15: #{cosine_similarity_pallas.1} parent=0 // pred_check_branch
    %16 = sbr.rel (0) target = $region17
  $region16: #{cosine_similarity_pallas.1} parent=0 // pred_region
    _
  $region17: #{cosine_similarity_pallas.1} parent=0 // pred_fallthru
    _
  %p17 = scmp.eq.s32.totalorder 0, 0
  // Predicated region
  $region18: #{cosine_similarity_pallas.1} parent=0 // pred_check
    %p18 = pneg %p17
  $region19: #{cosine_similarity_pallas.1} parent=0 // pred_check_branch
    %20 = sbr.rel (%p18) target = $region21
  $region20: #{cosine_similarity_pallas.1} parent=0 // pred_region
    %21 = vst [vmem:[%s4] sm:$0xff] 0.0
    %22 = vst [vmem:[%s4 + $0x8] sm:$0xff] 0.0
  $region21: #{cosine_similarity_pallas.1} parent=0 // pred_fallthru
    _
  %s23 = smul.u32 0, 128
  %s24 = sshra.s32 %s23, 7
  %s25 = sand.u32 %s23, 127
  %s26 = scalar_lea.vmem %s0, %s24
  %v27 = vld [vmem:[%s26] sm:$0xff]
  %v28 = vld [vmem:[%s26 + $0x8] sm:$0xff]
  %v29 = vld [vmem:[%s4] sm:$0xff]
  %v30 = vld [vmem:[%s4 + $0x8] sm:$0xff]
  %v31 = vld [vmem:[%s1] sm:$0xff]
  %v32 = vld [vmem:[%s1 + $0x8] sm:$0xff]
  %v33 = vld [vmem:[%s1 + $0x10] sm:$0xff]
  %v34 = vld [vmem:[%s1 + $0x18] sm:$0xff]
  %v35 = vld [vmem:[%s1 + $0x20] sm:$0xff]
  %v36 = vld [vmem:[%s1 + $0x28] sm:$0xff]
  %v37 = vld [vmem:[%s1 + $0x30] sm:$0xff]
  %v38 = vld [vmem:[%s1 + $0x38] sm:$0xff]
  %v39 = vld [vmem:[%s1 + $0x40] sm:$0xff]
  %v40 = vld [vmem:[%s1 + $0x48] sm:$0xff]
  %v41 = vld [vmem:[%s1 + $0x50] sm:$0xff]
  %v42 = vld [vmem:[%s1 + $0x58] sm:$0xff]
  %v43 = vld [vmem:[%s1 + $0x60] sm:$0xff]
  %v44 = vld [vmem:[%s1 + $0x68] sm:$0xff]
  %v45 = vld [vmem:[%s1 + $0x70] sm:$0xff]
  %v46 = vld [vmem:[%s1 + $0x78] sm:$0xff]
  %47 = vmatprep.subr.mxu0 0.0
  %48 = vmatpush1.msra.mxu0 %v46
  %49 = vmatprep.subr.mxu0 0.0
  %50 = vmatpush1.msra.mxu0 %v45
  %51 = vmatprep.subr.mxu0 0.0
  %52 = vmatpush1.msra.mxu0 %v44
  %53 = vmatprep.subr.mxu0 0.0
  %54 = vmatpush1.msra.mxu0 %v43
  %55 = vmatprep.subr.mxu0 0.0
  %56 = vmatpush1.msra.mxu0 %v42
  %57 = vmatprep.subr.mxu0 0.0
  %58 = vmatpush1.msra.mxu0 %v41
  %59 = vmatprep.subr.mxu0 0.0
  %60 = vmatpush1.msra.mxu0 %v40
  %61 = vmatprep.subr.mxu0 0.0
  %62 = vmatpush1.msra.mxu0 %v39
  %63 = vmatprep.subr.mxu0 0.0
  %64 = vmatpush1.msra.mxu0 %v38
  %65 = vmatprep.subr.mxu0 0.0
  %66 = vmatpush1.msra.mxu0 %v37
  %67 = vmatprep.subr.mxu0 0.0
  %68 = vmatpush1.msra.mxu0 %v36
  %69 = vmatprep.subr.mxu0 0.0
  %70 = vmatpush1.msra.mxu0 %v35
  %71 = vmatprep.subr.mxu0 0.0
  %72 = vmatpush1.msra.mxu0 %v34
  %73 = vmatprep.subr.mxu0 0.0
  %74 = vmatpush1.msra.mxu0 %v33
  %75 = vmatprep.subr.mxu0 0.0
  %76 = vmatpush1.msra.mxu0 %v32
  %77 = vmatprep.subr.mxu0 0.0
  %78 = vmatpush1.msra.mxu0 %v31
  %79 = vmatprep.subr.mxu0 0.0
  %80 = vmatpush2.msra.mxu0 0.0
  %81 = vmatprep.subr.mxu0 0.0
  %82 = vmatpush2.msra.mxu0 0.0
  %83 = vmatprep.subr.mxu0 0.0
  %84 = vmatpush2.msra.mxu0 0.0
  %85 = vmatprep.subr.mxu0 0.0
  %86 = vmatpush2.msra.mxu0 0.0
  %87 = vmatprep.subr.mxu0 0.0
  %88 = vmatpush2.msra.mxu0 0.0
  %89 = vmatprep.subr.mxu0 0.0
  %90 = vmatpush2.msra.mxu0 0.0
  %91 = vmatprep.subr.mxu0 0.0
  %92 = vmatpush2.msra.mxu0 0.0
  %93 = vmatprep.subr.mxu0 0.0
  %94 = vmatpush2.msra.mxu0 0.0
  %95 = vmatprep.subr.mxu0 0.0
  %96 = vmatpush2.msra.mxu0 0.0
  %97 = vmatprep.subr.mxu0 0.0
  %98 = vmatpush2.msra.mxu0 0.0
  %99 = vmatprep.subr.mxu0 0.0
  %100 = vmatpush2.msra.mxu0 0.0
  %101 = vmatprep.subr.mxu0 0.0
  %102 = vmatpush2.msra.mxu0 0.0
  %103 = vmatprep.subr.mxu0 0.0
  %104 = vmatpush2.msra.mxu0 0.0
  %105 = vmatprep.subr.mxu0 0.0
  %106 = vmatpush2.msra.mxu0 0.0
  %107 = vmatprep.subr.mxu0 0.0
  %108 = vmatpush2.msra.mxu0 0.0
  %109 = vmatprep.subr.mxu0 0.0
  %110 = vmatpush2.msra.mxu0 0.0
  %111 = vmatprep.mubr.f32.mxu0 0.0
  %112 = vmatmul.mubr.f32.gmra.mxu0 %v27
  %v113 = vpop.f32.mrf.mxu0
  %v114 = vadd.f32 0.0, %v113
  %v115 = vpop.f32.mrf.mxu0
  %116 = vmatprep.mubr.f32.mxu0 0.0
  %117 = vmatmul.mubr.f32.gmra.mxu0 %v28
  %v118 = vpop.f32.mrf.mxu0
  %v119 = vadd.f32 0.0, %v118
  %v120 = vpop.f32.mrf.mxu0
  %121 = vdwg.mxu0
  %v122 = vadd.f32 %v29, %v114
  %v123 = vadd.f32 %v30, %v119
  %124 = vst [vmem:[%s4] sm:$0xff] %v122
  %125 = vst [vmem:[%s4 + $0x8] sm:$0xff] %v123
  // Predicated region
  $region22: #{cosine_similarity_pallas.1} parent=0 // pred_check
    %p126 = pneg %p17
  $region23: #{cosine_similarity_pallas.1} parent=0 // pred_check_branch
    %128 = sbr.rel (%p126) target = $region25
  $region24: #{cosine_similarity_pallas.1} parent=0 // pred_region
    %v129 = vld [vmem:[%s4] sm:$0xff]
    %v130 = vld [vmem:[%s4 + $0x8] sm:$0xff]
    %v131 = vld [vmem:[%s2] sm:$0xff]
    %v132 = vld [vmem:[%s2 + $0x8] sm:$0xff]
    %v133 = vld [vmem:[%s3] sm:$0x1]
    %135 = vset.pattern.permute.xlu0 0
    %136 = vperm.xlu0 %135, %v131
    %v137 = vpop.permute.xlu0 %136
    %140 = vset.pattern.permute.xlu0 0
    %141 = vperm.xlu0 %140, %v132
    %v142 = vpop.permute.xlu0 %141
    %v145 = vlaneseq
    %v146 = vshrl.u32 %v145, 7
    %v147 = vsub.s32 0, %v146
    %v148 = vrot.slane %v133, %v147
    %v150 = vmul.f32 %v137, %v148
    %v151 = vmul.f32 %v142, %v148
    %v152 = vmul.f32 %v129, %v150
    %v153 = vmul.f32 %v130, %v151
    %154 = vst [vmem:[%s4] sm:$0xff] %v152
    %155 = vst [vmem:[%s4 + $0x8] sm:$0xff] %v153
  $region25: #{cosine_similarity_pallas.1} parent=0 // pred_fallthru
    _
  // Predicated region
  $region26: #{cosine_similarity_pallas.1} parent=0 // pred_check
    _
  $region27: #{cosine_similarity_pallas.1} parent=0 // pred_check_branch
    %157 = sbr.rel (0) target = $region29
  $region28: #{cosine_similarity_pallas.1} parent=0 // pred_region
    _
  $region29: #{cosine_similarity_pallas.1} parent=0 // pred_fallthru
    _
  // Predicated region
  $region30: #{cosine_similarity_pallas.1} parent=0 // pred_check
    _
  $region31: #{cosine_similarity_pallas.1} parent=0 // pred_check_branch
    %159 = sbr.rel (0) target = $region33
  $region32: #{cosine_similarity_pallas.1} parent=0 // pred_region
    _
  $region33: #{cosine_similarity_pallas.1} parent=0 // pred_fallthru
    _

</llo_original>
